<compile_context>
chip_gen: v7x
topology: tpu7x:2x2x1
jax: 0.10.0
libtpu: 0.0.40
codegen_flags: <defaults>
</compile_context>

<pallas_src>
import functools

import jax
import jax.numpy as jnp
from jax import lax
from jax.experimental import pallas as pl
from jax.experimental.pallas import tpu as pltpu


def _round_up(v, m):
    return ((v + m - 1) // m) * m


def _cdiv(a, b):
    return -(-a // b)


def _vmem_capacity_bytes():
    try:
        info = pltpu.get_tpu_info()
        cap = getattr(info, "vmem_capacity_bytes", None)
        if cap:
            return int(cap)
    except Exception:
        pass
    return 64 * 1024 * 1024  # conservative fallback (v7x per-TC VMEM)


def _biaffine_kernel(x_ref, w_ref, y_ref, o_ref, *, th, dy_p):
    # x_ref: (1, tsx, dx_p)     w_ref: (dx_p, th*dy_p)
    # y_ref: (1, tsy, dy_p)     o_ref: (1, th, tsx, tsy)
    x = x_ref[0]
    y = y_ref[0]
    # One fat GEMM across the heads of this tile: (tsx, dx_p)@(dx_p, th*dy_p).
    xw = jnp.dot(x, w_ref[...], preferred_element_type=jnp.float32)
    for o in range(th):  # static unroll; th is small (1 for the arc scorer)
        xw_o = xw[:, o * dy_p:(o + 1) * dy_p]  # 128-aligned lane slice
        # Contract the LAST dims of both operands (flash-attention-style NT
        # matmul) -> no explicit relayout of y.
        s = lax.dot_general(
            xw_o.astype(y.dtype), y,
            dimension_numbers=(((1,), (1,)), ((), ())),
            preferred_element_type=jnp.float32,
        )
        o_ref[0, o] = s.astype(o_ref.dtype)


def biaffine_forward(x, y, weight, bias_x=True, bias_y=True, *,
                     use_bf16=True, out_dtype=jnp.float32, max_sx_tile=None):
    """Pallas implementation of Biaffine.forward.

    x: [B, Sx, n_in], y: [B, Sy, n_in],
    weight: [n_out, n_in+bias_x, n_in+bias_y]
    Returns [B, n_out, Sx, Sy], squeezed along axis 1 if n_out == 1.
    """
    B, Sx, n_in = x.shape
    _, Sy, _ = y.shape
    n_out = weight.shape[0]
    Dx = n_in + int(bias_x)
    Dy = n_in + int(bias_y)
    assert weight.shape == (n_out, Dx, Dy)
    assert y.shape == (B, Sy, n_in)

    cdtype = jnp.bfloat16 if use_bf16 else jnp.float32
    isz = jnp.dtype(cdtype).itemsize
    osz = jnp.dtype(out_dtype).itemsize

    # Feature dims padded to lane width (zero padding: load-bearing for the
    # contraction; the bias "ones" column rides along).
    dx_p = _round_up(Dx, 128)
    dy_p = _round_up(Dy, 128)

    vmem_cap = _vmem_capacity_bytes()
    vmem_budget = int(0.60 * vmem_cap)
    if max_sx_tile is None:
        max_sx_tile = 1024 if vmem_cap > (80 << 20) else 512
    max_sx_tile = max(8, _round_up(max_sx_tile, 8))

    # --- choose tiles -------------------------------------------------------
    tsx = Sx if Sx <= max_sx_tile else max_sx_tile       # ==Sx or mult of 8
    tsy = Sy                                             # ==Sy or mult of 128
    th = n_out
    floor_tsx = Sx if Sx <= 128 else 128
    floor_tsy = Sy if Sy <= 128 else 128

    def _vmem_estimate(tsx_, tsy_, th_):
        x_blk = tsx_ * dx_p * isz
        y_blk = tsy_ * dy_p * isz
        w_blk = dx_p * th_ * dy_p * isz
        o_blk = th_ * tsx_ * tsy_ * osz
        xw_tmp = tsx_ * th_ * dy_p * 4
        s_tmp = tsx_ * tsy_ * 4
        return 2 * (x_blk + y_blk + w_blk + o_blk) + xw_tmp + s_tmp

    # Shrink order: heads -> Sy -> Sx (never below min(Sx,128) for tsx).
    while _vmem_estimate(tsx, tsy, th) > vmem_budget:
        if th > 1:
            th = max(1, th // 2)
        elif tsy > floor_tsy:
            tsy = max(floor_tsy, _round_up(tsy // 2, 128))
        elif tsx > floor_tsx:
            tsx = max(floor_tsx, _round_up(tsx // 2, 8))
        else:
            break  # smallest sane tiles; rely on vmem_limit below

    # Rebalance tiles so the tail block wastes as little work as possible.
    n_i = _cdiv(Sx, tsx)
    if n_i > 1:
        tsx = min(tsx, _round_up(_cdiv(Sx, n_i), 8))
    n_j = _cdiv(Sy, tsy)
    if n_j > 1:
        tsy = min(tsy, _round_up(_cdiv(Sy, n_j), 128))
    n_h = _cdiv(n_out, th)
    if n_h > 1:
        th = min(th, _cdiv(n_out, n_h))

    # Guarantee >=2 parallel grid tiles for v7x's two TensorCores when the
    # workload is big enough to amortize the extra step.
    if _cdiv(n_out, th) * B * _cdiv(Sx, tsx) * _cdiv(Sy, tsy) < 2:
        if Sx >= 256:
            tsx = _round_up(_cdiv(Sx, 2), 8)
        elif Sy >= 256:
            tsy = _round_up(_cdiv(Sy, 2), 128)

    n_i = _cdiv(Sx, tsx)
    n_j = _cdiv(Sy, tsy)
    n_h = _cdiv(n_out, th)

    # --- operands: pad ONLY the feature dims --------------------------------
    xa = jnp.zeros((B, Sx, dx_p), dtype=cdtype)
    xa = xa.at[:, :, :n_in].set(x.astype(cdtype))
    if bias_x:
        xa = xa.at[:, :, n_in].set(1.0)
    ya = jnp.zeros((B, Sy, dy_p), dtype=cdtype)
    ya = ya.at[:, :, :n_in].set(y.astype(cdtype))
    if bias_y:
        ya = ya.at[:, :, n_in].set(1.0)

    wp = jnp.zeros((n_out, dx_p, dy_p), dtype=cdtype)
    wp = wp.at[:, :Dx, :Dy].set(weight.astype(cdtype))
    # (dx_p, n_out*dy_p): fat first-GEMM weight, sliced per head-tile.
    w2 = jnp.transpose(wp, (1, 0, 2)).reshape(dx_p, n_out * dy_p)

    grid = (n_h, B, n_i, n_j)
    out_shape = jax.ShapeDtypeStruct((B, n_out, Sx, Sy), out_dtype)

    # Cost estimate from TRUE (unpadded) dims.
    flops = 2 * B * n_out * Sx * Dx * Dy + 2 * B * n_out * Sx * Dy * Sy
    bytes_accessed = (B * Sx * Dx * isz + B * Sy * Dy * isz
                      + n_out * Dx * Dy * isz + B * n_out * Sx * Sy * osz)
    cost = pl.CostEstimate(flops=int(flops), transcendentals=0,
                           bytes_accessed=int(bytes_accessed))

    est = _vmem_estimate(tsx, tsy, th)
    vmem_limit = max(int(1.25 * est), 32 * 1024 * 1024)
    vmem_limit = min(vmem_limit, int(0.78 * vmem_cap))
    vmem_limit = max(vmem_limit, est + (2 << 20))  # never below the blocks

    kernel = functools.partial(_biaffine_kernel, th=th, dy_p=dy_p)

    out = pl.pallas_call(
        kernel,
        out_shape=out_shape,
        grid=grid,
        in_specs=[
            pl.BlockSpec((1, tsx, dx_p), lambda h, b, i, j: (b, i, 0)),
            pl.BlockSpec((dx_p, th * dy_p), lambda h, b, i, j: (0, h)),
            pl.BlockSpec((1, tsy, dy_p), lambda h, b, i, j: (b, j, 0)),
        ],
        out_specs=pl.BlockSpec((1, th, tsx, tsy),
                               lambda h, b, i, j: (b, h, i, j)),
        compiler_params=pltpu.CompilerParams(
            dimension_semantics=("parallel", "parallel", "parallel", "parallel"),
            vmem_limit_bytes=vmem_limit,
        ),
        cost_estimate=cost,
    )(xa, w2, ya)

    if n_out == 1:
        out = jnp.squeeze(out, axis=1)  # matches torch .squeeze(1)
    return out


if __name__ == "__main__":
    # Module config: n_in=32, n_out=1, bias_x=True, bias_y=True
    n_in, n_out = 32, 1
    bias_x = bias_y = True
    B, Sx, Sy = 2, 8, 8

    key = jax.random.PRNGKey(0)
    kx, ky, kw = jax.random.split(key, 3)
    x = jax.random.normal(kx, (B, Sx, n_in), dtype=jnp.float32)
    y = jax.random.normal(ky, (B, Sy, n_in), dtype=jnp.float32)
    # __init__ zero-inits the weight; use a deterministic nonzero init so the
    # kernel output is non-trivial (shape per module: [n_out, n_in+1, n_in+1]).
    weight = 0.02 * jax.random.normal(
        kw, (n_out, n_in + int(bias_x), n_in + int(bias_y)), dtype=jnp.float32
    )

    # Plain-JAX reference (original module semantics).
    xr = jnp.concatenate([x, jnp.ones_like(x[..., :1])], axis=-1)
    yr = jnp.concatenate([y, jnp.ones_like(y[..., :1])], axis=-1)
    ref = jnp.einsum("bxi,oij,byj->boxy", xr, weight, yr).squeeze(1)

    # Exact-precision path (f32 operands).
    s32 = jax.block_until_ready(
        biaffine_forward(x, y, weight, bias_x=bias_x, bias_y=bias_y,
                         use_bf16=False))
    assert s32.shape == (B, Sx, Sy), s32.shape
    assert jnp.allclose(s32, ref, atol=1e-4, rtol=1e-4)

    # Default path (bf16 operands, f32 accumulation, f32 output).
    s16 = jax.block_until_ready(
        biaffine_forward(x, y, weight, bias_x=bias_x, bias_y=bias_y))
    assert s16.shape == (B, Sx, Sy), s16.shape
    assert jnp.allclose(s16, ref, atol=5e-2, rtol=5e-2)

    print("KERNEL_OK")
</pallas_src>

<mosaic_0001>
module attributes {stable_mosaic.version = 11 : i64} {
  func.func @_biaffine_kernel(%arg0: i32, %arg1: i32, %arg2: i32, %arg3: i32, %arg4: memref<1x8x128xf32, #tpu.memory_space<vmem>>, %arg5: memref<128x128xf32, #tpu.memory_space<vmem>>, %arg6: memref<1x8x128xf32, #tpu.memory_space<vmem>>, %arg7: memref<1x1x8x8xf32, #tpu.memory_space<vmem>>) attributes {dimension_semantics = [#tpu.dimension_semantics<parallel>, #tpu.dimension_semantics<parallel>, #tpu.dimension_semantics<parallel>, #tpu.dimension_semantics<parallel>], iteration_bounds = array<i64: 1, 2, 1, 1>, scalar_prefetch = 0 : i64, scratch_operands = 0 : i64, tpu.core_type = #tpu.core_type<tc>, window_params = [{transform_indices = @transform_0, window_bounds = array<i64: 1, 8, 128>}, {transform_indices = @transform_1, window_bounds = array<i64: 128, 128>}, {transform_indices = @transform_2, window_bounds = array<i64: 1, 8, 128>}, {transform_indices = @transform_3, window_bounds = array<i64: 1, 1, 8, 8>}]} {
    %c0 = arith.constant 0 : index
    %c0_0 = arith.constant 0 : index
    %c0_1 = arith.constant 0 : index
    %0 = vector.load %arg4[%c0, %c0_0, %c0_1] : memref<1x8x128xf32, #tpu.memory_space<vmem>>, vector<1x8x128xf32>
    %1 = vector.shape_cast %0 : vector<1x8x128xf32> to vector<8x128xf32>
    %c0_2 = arith.constant 0 : index
    %c0_3 = arith.constant 0 : index
    %c0_4 = arith.constant 0 : index
    %2 = vector.load %arg6[%c0_2, %c0_3, %c0_4] : memref<1x8x128xf32, #tpu.memory_space<vmem>>, vector<1x8x128xf32>
    %3 = vector.shape_cast %2 : vector<1x8x128xf32> to vector<8x128xf32>
    %c0_5 = arith.constant 0 : index
    %c0_6 = arith.constant 0 : index
    %4 = vector.load %arg5[%c0_5, %c0_6] : memref<128x128xf32, #tpu.memory_space<vmem>>, vector<128x128xf32>
    %cst = arith.constant dense<0.000000e+00> : vector<8x128xf32>
    %5 = tpu.matmul %1, %4, %cst {dimension_numbers = #tpu.dot_dimension_numbers<[1], [0], [0], [1], [0, 0, 1, 1], [], []>} : vector<8x128xf32>, vector<128x128xf32>, vector<8x128xf32> -> vector<8x128xf32>
    %cst_7 = arith.constant dense<0.000000e+00> : vector<8x8xf32>
    %6 = tpu.matmul %5, %3, %cst_7 {dimension_numbers = #tpu.dot_dimension_numbers<[1], [1], [0], [0], [0, 0, 1, 0], [], []>} : vector<8x128xf32>, vector<8x128xf32>, vector<8x8xf32> -> vector<8x8xf32>
    %c0_8 = arith.constant 0 : index
    %c0_9 = arith.constant 0 : index
    %c0_10 = arith.constant 0 : index
    %c0_11 = arith.constant 0 : index
    %7 = vector.load %arg7[%c0_8, %c0_9, %c0_10, %c0_11] : memref<1x1x8x8xf32, #tpu.memory_space<vmem>>, vector<1x1x8x8xf32>
    %8 = vector.shape_cast %7 : vector<1x1x8x8xf32> to vector<8x8xf32>
    %9 = vector.shape_cast %6 : vector<8x8xf32> to vector<1x1x8x8xf32>
    tpu.vector_store %arg7[%c0_8, %c0_9, %c0_10, %c0_11], %9 {strides = array<i32>} : memref<1x1x8x8xf32, #tpu.memory_space<vmem>>, vector<1x1x8x8xf32>,
    return
  }
  func.func @transform_0(%arg0: i32, %arg1: i32, %arg2: i32, %arg3: i32) -> (i32, i32, i32) {
    %c0_i32 = arith.constant 0 : i32
    %c0_i32_0 = arith.constant 0 : i32
    return %arg1, %arg2, %c0_i32 : i32, i32, i32
  }
  func.func @transform_1(%arg0: i32, %arg1: i32, %arg2: i32, %arg3: i32) -> (i32, i32) {
    %c0_i32 = arith.constant 0 : i32
    %c0_i32_0 = arith.constant 0 : i32
    return %c0_i32, %arg0 : i32, i32
  }
  func.func @transform_2(%arg0: i32, %arg1: i32, %arg2: i32, %arg3: i32) -> (i32, i32, i32) {
    %c0_i32 = arith.constant 0 : i32
    %c0_i32_0 = arith.constant 0 : i32
    return %arg1, %arg3, %c0_i32 : i32, i32, i32
  }
  func.func @transform_3(%arg0: i32, %arg1: i32, %arg2: i32, %arg3: i32) -> (i32, i32, i32, i32) {
    %c0_i32 = arith.constant 0 : i32
    return %arg1, %arg0, %arg2, %arg3 : i32, i32, i32, i32
  }
}

</mosaic_0001>

<llo_original>
// kernel: tpu_custom_call.1
$region0: #{tpu_custom_call.1}
  #allocation0 [shape = 'u32[]', space=smem, size = 0x4, offset = 0x4, fixed_abs, tag = 'smem constant byte address 0x4 - core index']
  #allocation1 [shape = 'u32[144,128]{1,0:T(1,128)}', space=vmem, size = 0x12000, scoped, tag = 'internal scratch']
  %s0 = inlined_call_operand.hbm [shape: f32[2,8,128], index: 0, kind: input, shape index: {}]
  %s1 = inlined_call_operand.hbm [shape: f32[128,128], index: 1, kind: input, shape index: {}]
  %s2 = inlined_call_operand.hbm [shape: f32[2,8,128], index: 2, kind: input, shape index: {}]
  %s3 = inlined_call_operand.hbm [shape: f32[2,1,8,8], index: 3, kind: output, shape index: {}]
  %s4 = sld [smem:[#allocation0]]
  $region57: #{tpu_custom_call.1} parent=0
    _
  %s6 = ssub.s32 1, %s4
  %s7 = scalar_select 0, %s6, %s4
  $region1: #{tpu_custom_call.1} parent=0
    #allocation2 [shape = 'u8[8192]{0}', space=vmem, size = 0x2000, scoped, tag = 'input window, operand 0']
    #allocation3 [shape = 's32[2]{0}', space=sflag, size = 0x8, scoped, tag = 'scoped memory for tpu_custom_call.1']
    #allocation4 [shape = 's32[2]{0}', space=sflag, size = 0x8, scoped, tag = 'scoped memory for tpu_custom_call.1']
    #allocation5 [shape = 'u8[65536]{0}', space=vmem, size = 0x10000, scoped, tag = 'input window, operand 1, single buffered']
    #allocation6 [shape = 's32[1]{0}', space=sflag, size = 0x4, scoped, tag = 'scoped memory for tpu_custom_call.1']
    #allocation7 [shape = 'u8[8192]{0}', space=vmem, size = 0x2000, scoped, tag = 'input window, operand 2']
    #allocation8 [shape = 'u8[8192]{0}', space=vmem, size = 0x2000, scoped, tag = 'output window, operand 0']
    %8 = vsyncpa [#allocation3], 0
    %s9 = scalar_lea.sflag [#allocation3], 1
    %10 = vsyncpa %s9, 0
    %11 = vsyncpa [#allocation6], 0
    %12 = vsyncpa [#allocation4], 0
    %s13 = scalar_lea.sflag [#allocation4], 1
    %14 = vsyncpa %s13, 0
    loop: start=0, step=1, limit=4
    $region2: #{tpu_custom_call.1} parent=1 // loop_pre_header
      _
    $region3: #{tpu_custom_call.1} parent=1 // loop_header
      %s16 = sphi 0, %s20
      %p17 = scmp.ge.s32.totalorder %s16, 4
      %s23 = sphi 0, %s49
      %s24 = sphi 0, %s45
      %s25 = sphi 0, %s41
      %s26 = sphi 0, %s37
      %s27 = sphi 0, %s23
      %s28 = sphi 0, %s24
      %s29 = sphi 0, %s25
      %s30 = sphi 0, %s26
      %s31 = sphi 0, %s27
      %s32 = sphi 0, %s28
      %s33 = sphi 0, %s29
      %s34 = sphi 0, %s30
      %s54 = sphi 0, %s56
      %s57 = sphi 0, %s54
      %s58 = sphi 0, %s57
      %s74 = sphi 0, %s58
      %s80 = sphi 0, %s82
      %s83 = sphi 0, %s80
      %s84 = sphi 0, %s83
      %s100 = sphi 0, %s84
      %s108 = sphi 0, %s110
      %s111 = sphi 0, %s108
      %s112 = sphi 0, %s111
      %s128 = sphi 0, %s112
      %s140 = sphi 0, %s142
      %s143 = sphi 0, %s140
      %s144 = sphi 0, %s143
      %s160 = sphi 0, %s144
    $region4: #{tpu_custom_call.1} parent=1 // loop_header_branch
      %19 = sbr.rel (%p17) target = $region8
    $region5: #{tpu_custom_call.1} parent=1 // loop_body
      %s21 = ssub.s32 %s16, 1
      %s22 = ssub.s32 %s16, 2
      %s35 = sadd.s32 1, %s26
      %p36 = scmp.ge.s32.totalorder %s35, 1
      %s37 = scalar_select %p36, 0, %s35
      %s38 = sadd.s32 1, %s25
      %s39 = scalar_select %p36, %s38, %s25
      %p40 = scmp.ge.s32.totalorder %s39, 1
      %s41 = scalar_select %p40, 0, %s39
      %s42 = sadd.s32 1, %s24
      %s43 = scalar_select %p40, %s42, %s24
      %p44 = scmp.ge.s32.totalorder %s43, 2
      %s45 = scalar_select %p44, 0, %s43
      %s46 = sadd.s32 1, %s23
      %s47 = scalar_select %p44, %s46, %s23
      %p48 = scmp.ge.s32.totalorder %s47, 1
      %s49 = scalar_select %p48, 0, %s47
      %s50 = ssub.s32 %s24, %s45
      %s51 = ssub.s32 %s25, %s41
      %s52 = sor.u32 %s50, %s51
      %p53 = scmp.eq.s32.totalorder %s52, 0
      %s55 = sadd.s32 %s54, 1
      %s56 = scalar_select %p53, %s54, %s55
      %p59 = pneg %p53
      %p60 = scmp.eq.s32.totalorder %s16, 1
      %p61 = por %p59, %p60
      %p62 = scmp.ne.s32.totalorder %s54, %s57
      %p63 = scmp.eq.s32.totalorder %s16, 0
      %p64 = por %p62, %p63
      %p65 = scmp.ne.s32.totalorder %s54, %s57
      %p66 = scmp.eq.s32.totalorder %s21, 1
      %p67 = por %p65, %p66
      %p68 = scmp.ne.s32.totalorder %s57, %s58
      %p69 = scmp.eq.s32.totalorder %s21, 0
      %p70 = por %p68, %p69
      %p71 = scmp.ne.s32.totalorder %s57, %s58
      %p72 = scmp.eq.s32.totalorder %s22, 1
      %p73 = por %p71, %p72
      %p75 = scmp.ne.s32.totalorder %s58, %s74
      %p76 = scmp.eq.s32.totalorder %s22, 0
      %p77 = por %p75, %p76
      %s78 = ssub.s32 %s23, %s49
      %p79 = scmp.eq.s32.totalorder %s78, 0
      %s81 = sadd.s32 %s80, 1
      %s82 = scalar_select %p79, %s80, %s81
      %p85 = pneg %p79
      %p86 = scmp.eq.s32.totalorder %s16, 1
      %p87 = por %p85, %p86
      %p88 = scmp.ne.s32.totalorder %s80, %s83
      %p89 = scmp.eq.s32.totalorder %s16, 0
      %p90 = por %p88, %p89
      %p91 = scmp.ne.s32.totalorder %s80, %s83
      %p92 = scmp.eq.s32.totalorder %s21, 1
      %p93 = por %p91, %p92
      %p94 = scmp.ne.s32.totalorder %s83, %s84
      %p95 = scmp.eq.s32.totalorder %s21, 0
      %p96 = por %p94, %p95
      %p97 = scmp.ne.s32.totalorder %s83, %s84
      %p98 = scmp.eq.s32.totalorder %s22, 1
      %p99 = por %p97, %p98
      %p101 = scmp.ne.s32.totalorder %s84, %s100
      %p102 = scmp.eq.s32.totalorder %s22, 0
      %p103 = por %p101, %p102
      %s104 = ssub.s32 %s24, %s45
      %s105 = ssub.s32 %s26, %s37
      %s106 = sor.u32 %s104, %s105
      %p107 = scmp.eq.s32.totalorder %s106, 0
      %s109 = sadd.s32 %s108, 1
      %s110 = scalar_select %p107, %s108, %s109
      %p113 = pneg %p107
      %p114 = scmp.eq.s32.totalorder %s16, 1
      %p115 = por %p113, %p114
      %p116 = scmp.ne.s32.totalorder %s108, %s111
      %p117 = scmp.eq.s32.totalorder %s16, 0
      %p118 = por %p116, %p117
      %p119 = scmp.ne.s32.totalorder %s108, %s111
      %p120 = scmp.eq.s32.totalorder %s21, 1
      %p121 = por %p119, %p120
      %p122 = scmp.ne.s32.totalorder %s111, %s112
      %p123 = scmp.eq.s32.totalorder %s21, 0
      %p124 = por %p122, %p123
      %p125 = scmp.ne.s32.totalorder %s111, %s112
      %p126 = scmp.eq.s32.totalorder %s22, 1
      %p127 = por %p125, %p126
      %p129 = scmp.ne.s32.totalorder %s112, %s128
      %p130 = scmp.eq.s32.totalorder %s22, 0
      %p131 = por %p129, %p130
      %s132 = ssub.s32 %s24, %s45
      %s133 = ssub.s32 %s23, %s49
      %s134 = sor.u32 %s132, %s133
      %s135 = ssub.s32 %s25, %s41
      %s136 = sor.u32 %s134, %s135
      %s137 = ssub.s32 %s26, %s37
      %s138 = sor.u32 %s136, %s137
      %p139 = scmp.eq.s32.totalorder %s138, 0
      %s141 = sadd.s32 %s140, 1
      %s142 = scalar_select %p139, %s140, %s141
      %p145 = pneg %p139
      %p146 = scmp.eq.s32.totalorder %s16, 1
      %p147 = por %p145, %p146
      %p148 = scmp.ne.s32.totalorder %s140, %s143
      %p149 = scmp.eq.s32.totalorder %s16, 0
      %p150 = por %p148, %p149
      %p151 = scmp.ne.s32.totalorder %s140, %s143
      %p152 = scmp.eq.s32.totalorder %s21, 1
      %p153 = por %p151, %p152
      %p154 = scmp.ne.s32.totalorder %s143, %s144
      %p155 = scmp.eq.s32.totalorder %s21, 0
      %p156 = por %p154, %p155
      %p157 = scmp.ne.s32.totalorder %s143, %s144
      %p158 = scmp.eq.s32.totalorder %s22, 1
      %p159 = por %p157, %p158
      %p161 = scmp.ne.s32.totalorder %s144, %s160
      %p162 = scmp.eq.s32.totalorder %s22, 0
      %p163 = por %p161, %p162
      %p164 = scmp.le.s32.totalorder 1, %s16
      %p165 = scmp.lt.s32.totalorder %s16, 3
      %p166 = pnand %p164, %p165
      %p167 = pneg %p166
      // Predicated region
      $region9: #{tpu_custom_call.1} parent=5 // pred_check
        _
      $region10: #{tpu_custom_call.1} parent=5 // pred_check_branch
        %169 = sbr.rel (%p166) target = $region12
      $region11: #{tpu_custom_call.1} parent=5 // pred_region
        %s170 = ssub.s32 %s16, 1
        // Predicated region
        $region13: #{tpu_custom_call.1} parent=11 // pred_check
          %p171 = pneg %p96
        $region14: #{tpu_custom_call.1} parent=11 // pred_check_branch
          %173 = sbr.rel (%p171) target = $region16
        $region15: #{tpu_custom_call.1} parent=11 // pred_region
          %s175 = ssub.s32 2048, 2048
          %176 = vsyncadd [#allocation6], %s175
          %s177 = smul.addr %s27, 128
          %s178 = scalar_lea.hbm %s1, %s177
          %s179 = sshll.u32 [#allocation5], 4
          %s180 = int_to_ptr.vmem [resolvable:$true] %s179
          %185 = dma.hbm_to_vmem [thread:$0]  %s178, 2048, %s180, [#allocation6], 128, 128, 8
        $region16: #{tpu_custom_call.1} parent=11 // pred_fallthru
          _
      $region12: #{tpu_custom_call.1} parent=5 // pred_fallthru
        _
      %p186 = scmp.lt.s32.totalorder %s16, 2
      // Predicated region
      $region17: #{tpu_custom_call.1} parent=5 // pred_check
        %p187 = pneg %p186
      $region18: #{tpu_custom_call.1} parent=5 // pred_check_branch
        %189 = sbr.rel (%p187) target = $region20
      $region19: #{tpu_custom_call.1} parent=5 // pred_region
        // Predicated region
        $region21: #{tpu_custom_call.1} parent=19 // pred_check
          %p190 = pneg %p64
        $region22: #{tpu_custom_call.1} parent=19 // pred_check_branch
          %192 = sbr.rel (%p190) target = $region24
        $region23: #{tpu_custom_call.1} parent=19 // pred_region
          %s193 = sand.u32 %s16, 1
          %s194 = scalar_lea.sflag [#allocation3], %s193
          %s195 = sand.u32 %s54, 1
          %s196 = smul.addr %s195, 8
          %s197 = scalar_lea.vmem [#allocation2], %s196
          %s199 = ssub.s32 128, 128
          %200 = vsyncadd %s194, %s199
          %s201 = sadd.s32 %s25, %s24
          %s202 = smul.addr %s201, 128
          %s203 = scalar_lea.hbm %s0, %s202
          %s205 = sshll.u32 %s197, 4
          %s206 = int_to_ptr.vmem [resolvable:$true] %s205
          %208 = dma.hbm_to_vmem [thread:$0]  %s203, 128, %s206, %s194
        $region24: #{tpu_custom_call.1} parent=19 // pred_fallthru
          _
        // Predicated region
        $region25: #{tpu_custom_call.1} parent=19 // pred_check
          %p209 = pneg %p118
        $region26: #{tpu_custom_call.1} parent=19 // pred_check_branch
          %211 = sbr.rel (%p209) target = $region28
        $region27: #{tpu_custom_call.1} parent=19 // pred_region
          %s212 = sand.u32 %s16, 1
          %s213 = scalar_lea.sflag [#allocation3], %s212
          %s214 = sand.u32 %s108, 1
          %s215 = smul.addr %s214, 8
          %s216 = scalar_lea.vmem [#allocation7], %s215
          %s218 = ssub.s32 128, 128
          %219 = vsyncadd %s213, %s218
          %s220 = sadd.s32 %s26, %s24
          %s221 = smul.addr %s220, 128
          %s222 = scalar_lea.hbm %s2, %s221
          %s224 = sshll.u32 %s216, 4
          %s225 = int_to_ptr.vmem [resolvable:$true] %s224
          %227 = dma.hbm_to_vmem [thread:$0]  %s222, 128, %s225, %s213
        $region28: #{tpu_custom_call.1} parent=19 // pred_fallthru
          _
      $region20: #{tpu_custom_call.1} parent=5 // pred_fallthru
        _
      %p228 = scmp.le.s32.totalorder 1, %s16
      %p229 = scmp.lt.s32.totalorder %s16, 3
      %p230 = pnand %p228, %p229
      %p231 = pneg %p230
      // Predicated region
      $region29: #{tpu_custom_call.1} parent=5 // pred_check
        _
      $region30: #{tpu_custom_call.1} parent=5 // pred_check_branch
        %233 = sbr.rel (%p230) target = $region32
      $region31: #{tpu_custom_call.1} parent=5 // pred_region
        %s234 = ssub.s32 %s16, 1
        %s235 = sand.u32 %s21, 1
        %s236 = scalar_lea.sflag [#allocation3], %s235
        %s237 = sand.u32 %s57, 1
        %s238 = smul.addr %s237, 8
        %s239 = scalar_lea.vmem [#allocation2], %s238
        // Predicated region
        $region33: #{tpu_custom_call.1} parent=31 // pred_check
          %p240 = pneg %p70
        $region34: #{tpu_custom_call.1} parent=31 // pred_check_branch
          %242 = sbr.rel (%p240) target = $region36
        $region35: #{tpu_custom_call.1} parent=31 // pred_region
          %243 = dma.done %s236, 128
        $region36: #{tpu_custom_call.1} parent=31 // pred_fallthru
          _
        // Predicated region
        $region37: #{tpu_custom_call.1} parent=31 // pred_check
          %p244 = pneg %p96
        $region38: #{tpu_custom_call.1} parent=31 // pred_check_branch
          %246 = sbr.rel (%p244) target = $region40
        $region39: #{tpu_custom_call.1} parent=31 // pred_region
          %247 = dma.done [#allocation6], 2048
        $region40: #{tpu_custom_call.1} parent=31 // pred_fallthru
          _
        %s248 = sand.u32 %s21, 1
        %s249 = scalar_lea.sflag [#allocation3], %s248
        %s250 = sand.u32 %s111, 1
        %s251 = smul.addr %s250, 8
        %s252 = scalar_lea.vmem [#allocation7], %s251
        // Predicated region
        $region41: #{tpu_custom_call.1} parent=31 // pred_check
          %p253 = pneg %p124
        $region42: #{tpu_custom_call.1} parent=31 // pred_check_branch
          %255 = sbr.rel (%p253) target = $region44
        $region43: #{tpu_custom_call.1} parent=31 // pred_region
          %256 = dma.done %s249, 128
        $region44: #{tpu_custom_call.1} parent=31 // pred_fallthru
          _
        %s257 = sand.u32 %s21, 1
        %s258 = scalar_lea.sflag [#allocation3], %s257
        %s259 = sand.u32 %s57, 1
        %s260 = smul.addr %s259, 8
        %s261 = scalar_lea.vmem [#allocation2], %s260
        %p262 = pneg %p70
        %p263 = pneg %p67
        %p264 = pneg %p96
        %p265 = pneg %p93
        %s266 = sand.u32 %s21, 1
        %s267 = scalar_lea.sflag [#allocation3], %s266
        %s268 = sand.u32 %s111, 1
        %s269 = smul.addr %s268, 8
        %s270 = scalar_lea.vmem [#allocation7], %s269
        %p271 = pneg %p124
        %p272 = pneg %p121
        %p273 = pneg %p156
        %p274 = pneg %p153
        %s275 = sand.u32 %s143, 1
        %s276 = scalar_lea.sflag [#allocation4], %s275
        %s277 = sand.u32 %s143, 1
        %s278 = smul.addr %s277, 8
        %s279 = scalar_lea.vmem [#allocation8], %s278
        %v280 = vld [vmem:[%s239] sm:$0xff]
        %v281 = vld [vmem:[%s252] sm:$0xff]
        %v282 = vld [vmem:[#allocation5] sm:$0xff]
        %v283 = vld [vmem:[#allocation5 + $0x8] sm:$0xff]
        %v284 = vld [vmem:[#allocation5 + $0x10] sm:$0xff]
        %v285 = vld [vmem:[#allocation5 + $0x18] sm:$0xff]
        %v286 = vld [vmem:[#allocation5 + $0x20] sm:$0xff]
        %v287 = vld [vmem:[#allocation5 + $0x28] sm:$0xff]
        %v288 = vld [vmem:[#allocation5 + $0x30] sm:$0xff]
        %v289 = vld [vmem:[#allocation5 + $0x38] sm:$0xff]
        %v290 = vld [vmem:[#allocation5 + $0x40] sm:$0xff]
        %v291 = vld [vmem:[#allocation5 + $0x48] sm:$0xff]
        %v292 = vld [vmem:[#allocation5 + $0x50] sm:$0xff]
        %v293 = vld [vmem:[#allocation5 + $0x58] sm:$0xff]
        %v294 = vld [vmem:[#allocation5 + $0x60] sm:$0xff]
        %v295 = vld [vmem:[#allocation5 + $0x68] sm:$0xff]
        %v296 = vld [vmem:[#allocation5 + $0x70] sm:$0xff]
        %v297 = vld [vmem:[#allocation5 + $0x78] sm:$0xff]
        %298 = vmatprep.subr.mxu0 0.0
        %299 = vmatpush1.msra.mxu0 %v282
        %300 = vmatprep.subr.mxu0 0.0
        %301 = vmatpush1.msra.mxu0 %v283
        %302 = vmatprep.subr.mxu0 0.0
        %303 = vmatpush1.msra.mxu0 %v284
        %304 = vmatprep.subr.mxu0 0.0
        %305 = vmatpush1.msra.mxu0 %v285
        %306 = vmatprep.subr.mxu0 0.0
        %307 = vmatpush1.msra.mxu0 %v286
        %308 = vmatprep.subr.mxu0 0.0
        %309 = vmatpush1.msra.mxu0 %v287
        %310 = vmatprep.subr.mxu0 0.0
        %311 = vmatpush1.msra.mxu0 %v288
        %312 = vmatprep.subr.mxu0 0.0
        %313 = vmatpush1.msra.mxu0 %v289
        %314 = vmatprep.subr.mxu0 0.0
        %315 = vmatpush1.msra.mxu0 %v290
        %316 = vmatprep.subr.mxu0 0.0
        %317 = vmatpush1.msra.mxu0 %v291
        %318 = vmatprep.subr.mxu0 0.0
        %319 = vmatpush1.msra.mxu0 %v292
        %320 = vmatprep.subr.mxu0 0.0
        %321 = vmatpush1.msra.mxu0 %v293
        %322 = vmatprep.subr.mxu0 0.0
        %323 = vmatpush1.msra.mxu0 %v294
        %324 = vmatprep.subr.mxu0 0.0
        %325 = vmatpush1.msra.mxu0 %v295
        %326 = vmatprep.subr.mxu0 0.0
        %327 = vmatpush1.msra.mxu0 %v296
        %328 = vmatprep.subr.mxu0 0.0
        %329 = vmatpush1.msra.mxu0 %v297
        %330 = vmatprep.subr.mxu0 0.0
        %331 = vmatpush1.msra.mxu0 0.0
        %332 = vmatprep.subr.mxu0 0.0
        %333 = vmatpush1.msra.mxu0 0.0
        %334 = vmatprep.subr.mxu0 0.0
        %335 = vmatpush1.msra.mxu0 0.0
        %336 = vmatprep.subr.mxu0 0.0
        %337 = vmatpush1.msra.mxu0 0.0
        %338 = vmatprep.subr.mxu0 0.0
        %339 = vmatpush1.msra.mxu0 0.0
        %340 = vmatprep.subr.mxu0 0.0
        %341 = vmatpush1.msra.mxu0 0.0
        %342 = vmatprep.subr.mxu0 0.0
        %343 = vmatpush1.msra.mxu0 0.0
        %344 = vmatprep.subr.mxu0 0.0
        %345 = vmatpush1.msra.mxu0 0.0
        %346 = vmatprep.subr.mxu0 0.0
        %347 = vmatpush1.msra.mxu0 0.0
        %348 = vmatprep.subr.mxu0 0.0
        %349 = vmatpush1.msra.mxu0 0.0
        %350 = vmatprep.subr.mxu0 0.0
        %351 = vmatpush1.msra.mxu0 0.0
        %352 = vmatprep.subr.mxu0 0.0
        %353 = vmatpush1.msra.mxu0 0.0
        %354 = vmatprep.subr.mxu0 0.0
        %355 = vmatpush1.msra.mxu0 0.0
        %356 = vmatprep.subr.mxu0 0.0
        %357 = vmatpush1.msra.mxu0 0.0
        %358 = vmatprep.subr.mxu0 0.0
        %359 = vmatpush1.msra.mxu0 0.0
        %360 = vmatprep.subr.mxu0 0.0
        %361 = vmatpush1.msra.mxu0 0.0
        %362 = vmatprep.mubr.f32.mxu0 0.0
        %363 = vmatmul.mubr.f32.gmra.mrb[0].mxu0 %v280
        %v364 = vpop.f32.mrb[0].mxu0
        %v365 = vadd.f32 0.0, %v364
        %v366 = vpop.f32.mrb[0].mxu0
        %367 = vdwg.mxu0
        %368 = vmatprep.subr.mxu0 0.0
        %369 = vmatpush1.xpose.msra.mxu0 %v281
        %370 = vmatprep.subr.mxu0 0.0
        %371 = vmatpush1.xpose.msra.mxu0 0.0
        %372 = vmatprep.subr.mxu0 0.0
        %373 = vmatpush1.xpose.msra.mxu0 0.0
        %374 = vmatprep.subr.mxu0 0.0
        %375 = vmatpush1.xpose.msra.mxu0 0.0
        %376 = vmatprep.subr.mxu0 0.0
        %377 = vmatpush1.xpose.msra.mxu0 0.0
        %378 = vmatprep.subr.mxu0 0.0
        %379 = vmatpush1.xpose.msra.mxu0 0.0
        %380 = vmatprep.subr.mxu0 0.0
        %381 = vmatpush1.xpose.msra.mxu0 0.0
        %382 = vmatprep.subr.mxu0 0.0
        %383 = vmatpush1.xpose.msra.mxu0 0.0
        %384 = vmatprep.subr.mxu0 0.0
        %385 = vmatpush1.xpose.msra.mxu0 0.0
        %386 = vmatprep.subr.mxu0 0.0
        %387 = vmatpush1.xpose.msra.mxu0 0.0
        %388 = vmatprep.subr.mxu0 0.0
        %389 = vmatpush1.xpose.msra.mxu0 0.0
        %390 = vmatprep.subr.mxu0 0.0
        %391 = vmatpush1.xpose.msra.mxu0 0.0
        %392 = vmatprep.subr.mxu0 0.0
        %393 = vmatpush1.xpose.msra.mxu0 0.0
        %394 = vmatprep.subr.mxu0 0.0
        %395 = vmatpush1.xpose.msra.mxu0 0.0
        %396 = vmatprep.subr.mxu0 0.0
        %397 = vmatpush1.xpose.msra.mxu0 0.0
        %398 = vmatprep.subr.mxu0 0.0
        %399 = vmatpush1.xpose.msra.mxu0 0.0
        %400 = vmatprep.subr.mxu0 0.0
        %401 = vmatpush1.xpose.msra.mxu0 0.0
        %402 = vmatprep.subr.mxu0 0.0
        %403 = vmatpush1.xpose.msra.mxu0 0.0
        %404 = vmatprep.subr.mxu0 0.0
        %405 = vmatpush1.xpose.msra.mxu0 0.0
        %406 = vmatprep.subr.mxu0 0.0
        %407 = vmatpush1.xpose.msra.mxu0 0.0
        %408 = vmatprep.subr.mxu0 0.0
        %409 = vmatpush1.xpose.msra.mxu0 0.0
        %410 = vmatprep.subr.mxu0 0.0
        %411 = vmatpush1.xpose.msra.mxu0 0.0
        %412 = vmatprep.subr.mxu0 0.0
        %413 = vmatpush1.xpose.msra.mxu0 0.0
        %414 = vmatprep.subr.mxu0 0.0
        %415 = vmatpush1.xpose.msra.mxu0 0.0
        %416 = vmatprep.subr.mxu0 0.0
        %417 = vmatpush1.xpose.msra.mxu0 0.0
        %418 = vmatprep.subr.mxu0 0.0
        %419 = vmatpush1.xpose.msra.mxu0 0.0
        %420 = vmatprep.subr.mxu0 0.0
        %421 = vmatpush1.xpose.msra.mxu0 0.0
        %422 = vmatprep.subr.mxu0 0.0
        %423 = vmatpush1.xpose.msra.mxu0 0.0
        %424 = vmatprep.subr.mxu0 0.0
        %425 = vmatpush1.xpose.msra.mxu0 0.0
        %426 = vmatprep.subr.mxu0 0.0
        %427 = vmatpush1.xpose.msra.mxu0 0.0
        %428 = vmatprep.subr.mxu0 0.0
        %429 = vmatpush1.xpose.msra.mxu0 0.0
        %430 = vmatprep.subr.mxu0 0.0
        %431 = vmatpush1.xpose.msra.mxu0 0.0
        %432 = vmatprep.mubr.f32.mxu0 0.0
        %433 = vmatmul.mubr.f32.gmra.mrb[0].mxu0 %v365
        %v434 = vpop.f32.mrb[0].mxu0
        %v435 = vadd.f32 0.0, %v434
        %v436 = vpop.f32.mrb[0].mxu0
        %437 = vdwg.mxu0
        %vm438 = vcmask 64512
        %439 = vst.msk [vmem:[%s279] sm:$0xff] %vm438, %v435
        %s440 = sand.u32 %s143, 1
        %s441 = scalar_lea.sflag [#allocation4], %s440
        %s442 = sand.u32 %s143, 1
        %s443 = smul.addr %s442, 8
        %s444 = scalar_lea.vmem [#allocation8], %s443
        // Predicated region
        $region45: #{tpu_custom_call.1} parent=31 // pred_check
          %p445 = pneg %p153
        $region46: #{tpu_custom_call.1} parent=31 // pred_check_branch
          %447 = sbr.rel (%p445) target = $region48
        $region47: #{tpu_custom_call.1} parent=31 // pred_region
          %s449 = ssub.s32 128, 128
          %450 = vsyncadd %s441, %s449
          %s451 = sadd.s32 %s30, %s29
          %s452 = sadd.s32 %s451, %s27
          %s453 = sadd.s32 %s452, %s28
          %s454 = smul.addr %s453, 128
          %s455 = scalar_lea.hbm %s3, %s454
          %s457 = sshll.u32 %s444, 4
          %s458 = int_to_ptr.vmem [resolvable:$true] %s457
          %460 = dma.vmem_to_hbm [thread:$0]  %s458, 128, %s455, %s441
        $region48: #{tpu_custom_call.1} parent=31 // pred_fallthru
          _
      $region32: #{tpu_custom_call.1} parent=5 // pred_fallthru
        _
      %p461 = scmp.le.s32.totalorder 2, %s16
      // Predicated region
      $region49: #{tpu_custom_call.1} parent=5 // pred_check
        %p462 = pneg %p461
      $region50: #{tpu_custom_call.1} parent=5 // pred_check_branch
        %464 = sbr.rel (%p462) target = $region52
      $region51: #{tpu_custom_call.1} parent=5 // pred_region
        %s465 = ssub.s32 %s16, 2
        // Predicated region
        $region53: #{tpu_custom_call.1} parent=51 // pred_check
          %p466 = pneg %p159
        $region54: #{tpu_custom_call.1} parent=51 // pred_check_branch
          %468 = sbr.rel (%p466) target = $region56
        $region55: #{tpu_custom_call.1} parent=51 // pred_region
          %s469 = sand.u32 %s144, 1
          %s470 = scalar_lea.sflag [#allocation4], %s469
          %s471 = sand.u32 %s144, 1
          %s472 = smul.addr %s471, 8
          %s473 = scalar_lea.vmem [#allocation8], %s472
          %474 = dma.done %s470, 128
        $region56: #{tpu_custom_call.1} parent=51 // pred_fallthru
          _
      $region52: #{tpu_custom_call.1} parent=5 // pred_fallthru
        _
    $region6: #{tpu_custom_call.1} parent=1 // loop_footer
      %s20 = sadd.s32 1, %s16
    $region7: #{tpu_custom_call.1} parent=1 // loop_footer_branch
      %15 = sbr.rel target = $region3
    $region8: #{tpu_custom_call.1} parent=1 // loop_exit
      _
    %475 = vsyncpa [#allocation3], 1
    %s476 = scalar_lea.sflag [#allocation3], 1
    %477 = vsyncpa %s476, 1
    %478 = vsyncpa [#allocation6], 1
    %479 = vsyncpa [#allocation4], 1
    %s480 = scalar_lea.sflag [#allocation4], 1
    %481 = vsyncpa %s480, 1

</llo_original>
